<compile_context>
chip_gen: v5e
topology: v5e:2x2
jax: 0.10.0
libtpu: 0.0.40
codegen_flags: <defaults>
</compile_context>

<pallas_src>
from functools import partial

import jax
import jax.numpy as jnp
from jax import lax
from jax.experimental import pallas as pl
from jax.experimental.pallas import tpu as pltpu


# Scoped VMEM cap: sized for v5e/v6e (128 MiB physical).
# TODO(synk): on v7x (64 MiB VMEM per TC) drop this to <=48 MiB and re-derive row tiles.
_VMEM_LIMIT = 64 * 1024 * 1024


# ---------------------------------------------------------------------------
# Kernel 1: fused LayerNorm + QKV projection (to_q / to_kv, no bias)
#           - scale folded into wq host-side, bf16 output
# ---------------------------------------------------------------------------
def _ln_qkv_kernel(x_ref, g_ref, b_ref, w_ref, o_ref):
    x = x_ref[...]                                        # (bm, d) f32
    mu = jnp.mean(x, axis=-1, keepdims=True)
    xc = x - mu
    var = jnp.mean(xc * xc, axis=-1, keepdims=True)
    xn = xc * lax.rsqrt(var + 1e-5) * g_ref[...] + b_ref[...]
    y = jnp.dot(xn.astype(jnp.bfloat16), w_ref[...],
                preferred_element_type=jnp.float32)
    o_ref[...] = y.astype(o_ref.dtype)                    # bf16 store (half HBM write)


def ln_qkv_proj(x2d, gamma, beta, w_qkv_bf16, *, block_rows=512):
    M, D = x2d.shape
    N = w_qkv_bf16.shape[1]
    bm = min(block_rows, M)
    return pl.pallas_call(
        _ln_qkv_kernel,
        out_shape=jax.ShapeDtypeStruct((M, N), jnp.bfloat16),
        grid=(pl.cdiv(M, bm),),
        in_specs=[pl.BlockSpec((bm, D), lambda i: (i, 0)),
                  pl.BlockSpec((1, D), lambda i: (0, 0)),
                  pl.BlockSpec((1, D), lambda i: (0, 0)),
                  pl.BlockSpec((D, N), lambda i: (0, 0))],     # weights resident
        out_specs=pl.BlockSpec((bm, N), lambda i: (i, 0)),
        compiler_params=pltpu.CompilerParams(
            dimension_semantics=("parallel",),
            vmem_limit_bytes=_VMEM_LIMIT),
    )(x2d, gamma.reshape(1, D), beta.reshape(1, D), w_qkv_bf16)


# ---------------------------------------------------------------------------
# Kernel 2: sinkhorn bucket attention (all heads of one sample per grid step)
#           + to_out projection + bias + residual add
# ---------------------------------------------------------------------------
def _sinkhorn_attn_kernel(qkv_ref, x_ref, wo_ref, bo_ref, r_ref, o_ref,
                          *, h, dh, nb, bsz):
    # qkv_ref: (1, t, 3*h*dh) bf16 (q already scaled)   x_ref: (1, t, d) f32
    # wo_ref : (h*dh, d) bf16   bo_ref: (1, d) f32      r_ref: (1, h, nb, nb) f32
    dm = h * dh
    t = nb * bsz
    d = o_ref.shape[-1]

    wo_all = wo_ref[...]                                   # (dm, d) bf16, loaded once
    acc = jnp.zeros((t, d), jnp.float32)                   # fused to_out accumulator

    for hh in range(h):                                    # static loop over heads
        q_h = qkv_ref[0, :, hh * dh:(hh + 1) * dh]                   # (t, dh) bf16
        k_h = qkv_ref[0, :, dm + hh * dh:dm + (hh + 1) * dh]         # (t, dh) bf16
        v_h = qkv_ref[0, :, 2 * dm + hh * dh:2 * dm + (hh + 1) * dh] # (t, dh) bf16
        r_h = r_ref[0, hh]                                            # (nb, nb) f32 (pre-thresholded)

        bucket_rows = []
        for i in range(nb):                                # static loop: query buckets
            q_i = q_h[i * bsz:(i + 1) * bsz, :]                       # (bsz, dh)
            # scores of this query bucket against ALL keys -> (bsz, t); the full (t, t)
            # matrix is never materialized.
            s = lax.dot_general(q_i, k_h,
                                dimension_numbers=(((1,), (1,)), ((), ())),
                                preferred_element_type=jnp.float32)
            m_row = jnp.max(s, axis=-1, keepdims=True)
            e = jnp.exp(s - m_row)                         # single exp pass, entries <= 1
            # per-key-bucket softmax denominators: one reshape + reduce (no per-j slices)
            e3 = e.reshape(bsz, nb, bsz)
            sum_blk = jnp.sum(e3, axis=-1)                 # (bsz, nb)
            # denom_j = sum(exp(self)) + sum(exp(bucket j)); the global-row-max shift
            # cancels exactly (softmax shift invariance), clamp only guards fp32 underflow.
            denom = jnp.maximum(sum_blk[:, i:i + 1] + sum_blk, 1e-30)
            inv = pl.reciprocal(denom, approx=True)        # (bsz, nb)
            coef = inv * r_h[i:i + 1, :]                   # routing weight / denom per bucket
            alpha = jnp.sum(coef, axis=-1, keepdims=True)  # (bsz, 1) self-bucket scale
            # routed term: ONE (bsz, t) @ (t, dh) matmul (K = t)
            w_routed = (e3 * coef[:, :, None]).reshape(bsz, t).astype(jnp.bfloat16)
            routed = jnp.dot(w_routed, v_h, preferred_element_type=jnp.float32)
            # self term: ONE (bsz, bsz) @ (bsz, dh) matmul, scaled per row by alpha
            e_self = e[:, i * bsz:(i + 1) * bsz].astype(jnp.bfloat16)
            self_term = jnp.dot(e_self, v_h[i * bsz:(i + 1) * bsz, :],
                                preferred_element_type=jnp.float32)
            bucket_rows.append(routed + alpha * self_term)            # (bsz, dh)

        attn_h = jnp.concatenate(bucket_rows, axis=0)                  # (t, dh) sublane concat
        # accumulate the to_out partial product per head (no lane concat across heads)
        acc = acc + jnp.dot(attn_h.astype(jnp.bfloat16),
                            wo_all[hh * dh:(hh + 1) * dh, :],
                            preferred_element_type=jnp.float32)

    o_ref[0, :, :] = x_ref[0] + acc + bo_ref[...]           # fused bias + residual add


def sinkhorn_attention_block(qkv3, x, wo_bf16, bo, R_eff, *, heads, dim_head, bucket_sz):
    b, t, d = x.shape
    dm = heads * dim_head
    nb = t // bucket_sz

    return pl.pallas_call(
        partial(_sinkhorn_attn_kernel, h=heads, dh=dim_head, nb=nb, bsz=bucket_sz),
        out_shape=jax.ShapeDtypeStruct((b, t, d), jnp.float32),
        grid=(b,),
        in_specs=[pl.BlockSpec((1, t, 3 * dm), lambda bi: (bi, 0, 0)),     # qkv (bf16)
                  pl.BlockSpec((1, t, d), lambda bi: (bi, 0, 0)),          # residual x
                  pl.BlockSpec((dm, d), lambda bi: (0, 0)),                # wo (resident)
                  pl.BlockSpec((1, d), lambda bi: (0, 0)),                 # bo
                  pl.BlockSpec((1, heads, nb, nb), lambda bi: (bi, 0, 0, 0))],  # routing R
        out_specs=pl.BlockSpec((1, t, d), lambda bi: (bi, 0, 0)),
        compiler_params=pltpu.CompilerParams(
            dimension_semantics=("parallel",),
            vmem_limit_bytes=_VMEM_LIMIT),
    )(qkv3, x, wo_bf16, bo.reshape(1, d), R_eff)


# ---------------------------------------------------------------------------
# Kernel 3: fused LayerNorm + FeedForward (GELU) + residual add
# ---------------------------------------------------------------------------
def _ln_ff_kernel(x_ref, g_ref, b_ref, w1_ref, b1_ref, w2_ref, b2_ref, o_ref):
    x = x_ref[...]                                        # (bm, d) f32
    mu = jnp.mean(x, axis=-1, keepdims=True)
    xc = x - mu
    var = jnp.mean(xc * xc, axis=-1, keepdims=True)
    xn = xc * lax.rsqrt(var + 1e-5) * g_ref[...] + b_ref[...]
    h1 = jnp.dot(xn.astype(jnp.bfloat16), w1_ref[...],
                 preferred_element_type=jnp.float32) + b1_ref[...]
    # tanh-form GELU (the module's GELU_ fallback): runs on the EUP instead of a VPU
    # erf polynomial, freeing VALU slots for the LN/bias/residual work.
    h1 = jax.nn.gelu(h1, approximate=True)
    ff = jnp.dot(h1.astype(jnp.bfloat16), w2_ref[...],
                 preferred_element_type=jnp.float32) + b2_ref[...]
    o_ref[...] = x + ff                                   # fused residual add


def ln_ff_residual(x, layer, *, block_rows=512):
    # TODO(synk): on v7x, tile the hidden dim (w1 cols / w2 rows, resident f32 accumulator)
    #             once 16*d^2 bytes of resident bf16 weights exceed ~half the scoped VMEM.
    b, t, d = x.shape
    M = b * t
    hdim = layer['w1'].shape[1]
    bm = min(block_rows, M)
    out = pl.pallas_call(
        _ln_ff_kernel,
        out_shape=jax.ShapeDtypeStruct((M, d), jnp.float32),
        grid=(pl.cdiv(M, bm),),
        in_specs=[pl.BlockSpec((bm, d), lambda i: (i, 0)),
                  pl.BlockSpec((1, d), lambda i: (0, 0)),
                  pl.BlockSpec((1, d), lambda i: (0, 0)),
                  pl.BlockSpec((d, hdim), lambda i: (0, 0)),     # w1 resident
                  pl.BlockSpec((1, hdim), lambda i: (0, 0)),
                  pl.BlockSpec((hdim, d), lambda i: (0, 0)),     # w2 resident
                  pl.BlockSpec((1, d), lambda i: (0, 0))],
        out_specs=pl.BlockSpec((bm, d), lambda i: (i, 0)),
        compiler_params=pltpu.CompilerParams(
            dimension_semantics=("parallel",),
            vmem_limit_bytes=_VMEM_LIMIT),
    )(x.reshape(M, d),
      layer['ln2_g'].reshape(1, d), layer['ln2_b'].reshape(1, d),
      layer['w1'].astype(jnp.bfloat16), layer['b1'].reshape(1, hdim),
      layer['w2'].astype(jnp.bfloat16), layer['b2'].reshape(1, d))
    return out.reshape(b, t, d)


# ------------------------ JAX glue (tiny sort-net) ---------------------------
def gumbel_sinkhorn_sort_net(qs, ks, key, sinkhorn_iter=5, temperature=0.75):
    # AttentionSortNet + gumbel_sinkhorn on (bh, nb, dh) bucket sums -> (bh, nb, nb).
    # NOTE: qs already carries the 1/sqrt(dh) scale (folded into wq), so the reference
    #       dim**-0.5 factor is NOT applied again here.
    R = jnp.einsum('bie,bje->bij', qs, ks)
    R = jnp.maximum(R, 0.0)                               # F.relu
    eps = 1e-6
    r = jnp.log(R + eps)                                  # log(t, eps)
    u = jax.random.uniform(key, r.shape, dtype=r.dtype)
    g = -jnp.log(-jnp.log(u + eps) + eps)                 # sample_gumbel
    r = (r + g) / temperature
    for _ in range(sinkhorn_iter):                        # sinkhorn_sorting_operator
        r = r - jax.nn.logsumexp(r, axis=2, keepdims=True)
        r = r - jax.nn.logsumexp(r, axis=1, keepdims=True)
    return jnp.exp(r)


# ---------------------------- module forward ---------------------------------
def sinkhorn_self_attention(x, layer, bucket_sz, key):
    b, t, d = x.shape
    h, dh = layer['heads'], layer['dim_head']
    dm = h * dh
    nb = t // bucket_sz
    scale = float(dh) ** -0.5

    # fused PreNorm(LayerNorm) + to_q/to_kv projection; scale folded into wq; bf16 out
    w_qkv = jnp.concatenate([layer['wq'] * scale, layer['wkv']],
                            axis=1).astype(jnp.bfloat16)
    qkv = ln_qkv_proj(x.reshape(b * t, d), layer['ln1_g'], layer['ln1_b'], w_qkv)
    qkv3 = qkv.reshape(b, t, 3 * dm)

    # sort-net bucket sums (tiny tensors, plain JAX); f32 accumulation of the bf16 qkv.
    # TODO(synk): could be emitted as a second small output of kernel 1 to avoid this re-read.
    q4 = qkv3[:, :, :dm].astype(jnp.float32).reshape(b, nb, bucket_sz, h, dh)
    k4 = qkv3[:, :, dm:2 * dm].astype(jnp.float32).reshape(b, nb, bucket_sz, h, dh)
    qs = q4.sum(axis=2).transpose(0, 2, 1, 3).reshape(b * h, nb, dh)
    ks = k4.sum(axis=2).transpose(0, 2, 1, 3).reshape(b * h, nb, dh)
    R = gumbel_sinkhorn_sort_net(qs, ks, key, sinkhorn_iter=5, temperature=0.75)
    # pre-threshold routing weights in the wrapper (R_ij <= 0.001 -> zero contribution)
    R_eff = jnp.where(R > 0.001, R, 0.0).reshape(b, h, nb, nb).astype(jnp.float32)

    # fused bucketed sinkhorn attention + to_out projection + residual add
    return sinkhorn_attention_block(qkv3, x, layer['wo'].astype(jnp.bfloat16),
                                    layer['bo'], R_eff,
                                    heads=h, dim_head=dh, bucket_sz=bucket_sz)


def sinkhorn_block_forward(x, bucket_sz, params, key):
    keys = jax.random.split(key, len(params['layers']))
    for layer, lk in zip(params['layers'], keys):
        x = sinkhorn_self_attention(x, layer, bucket_sz, lk)   # x + to_out(attn(norm(x)))
        x = ln_ff_residual(x, layer)                           # x + ff(norm(x))
    return x


# ------------------------------ params init ----------------------------------
def init_params(key, dim, depth, heads, dim_head, ff_mult=4):
    dm = heads * dim_head
    layers = []
    k = key

    def nrm(kk, shape, scale=0.05):
        return scale * jax.random.normal(kk, shape, dtype=jnp.float32)

    for _ in range(depth):
        ks = jax.random.split(k, 9)
        k = ks[0]
        layers.append(dict(
            heads=heads, dim_head=dim_head,
            ln1_g=jnp.ones((dim,), jnp.float32), ln1_b=jnp.zeros((dim,), jnp.float32),
            ln2_g=jnp.ones((dim,), jnp.float32), ln2_b=jnp.zeros((dim,), jnp.float32),
            wq=nrm(ks[1], (dim, dm)),
            wkv=nrm(ks[2], (dim, 2 * dm)),
            wo=nrm(ks[3], (dm, dim)), bo=nrm(ks[4], (dim,)),
            w1=nrm(ks[5], (dim, dim * ff_mult)), b1=nrm(ks[6], (dim * ff_mult,)),
            w2=nrm(ks[7], (dim * ff_mult, dim)), b2=nrm(ks[8], (dim,)),
        ))
    return {'layers': layers}


if __name__ == "__main__":
    key = jax.random.PRNGKey(0)
    # NOTE: demo shapes are tiny for a quick functional check; production shapes should
    # use d / dm as multiples of 128 and bucket_sz >= 128 to stay above the MXU/vreg floor.
    b, t, dim, heads, depth = 2, 16, 32, 4, 2
    dim_head = dim // heads
    bucket_sz = 8  # i.e. bucket_size = [[8, 8], [8, 8]] (uniform buckets per sample)

    kx, kp, kg = jax.random.split(key, 3)
    x = jax.random.normal(kx, (b, t, dim), dtype=jnp.float32)
    params = init_params(kp, dim, depth, heads, dim_head)

    out = sinkhorn_block_forward(x, bucket_sz, params, kg)
    jax.block_until_ready(out)
    assert out.shape == (b, t, dim) and bool(jnp.all(jnp.isfinite(out)))
    print("KERNEL_OK")
</pallas_src>

<mosaic_0001>
module attributes {stable_mosaic.version = 11 : i64} {
  func.func @_ln_qkv_kernel(%arg0: i32, %arg1: memref<32x32xf32, #tpu.memory_space<vmem>>, %arg2: memref<1x32xf32, #tpu.memory_space<vmem>>, %arg3: memref<1x32xf32, #tpu.memory_space<vmem>>, %arg4: memref<32x96xbf16, #tpu.memory_space<vmem>>, %arg5: memref<32x96xbf16, #tpu.memory_space<vmem>>) attributes {dimension_semantics = [#tpu.dimension_semantics<parallel>], iteration_bounds = array<i64: 1>, scalar_prefetch = 0 : i64, scratch_operands = 0 : i64, tpu.core_type = #tpu.core_type<tc>, window_params = [{transform_indices = @transform_0, window_bounds = array<i64: 32, 32>}, {pipeline_mode = #tpu.pipeline_mode<synchronous>, transform_indices = @transform_1, window_bounds = array<i64: 1, 32>}, {pipeline_mode = #tpu.pipeline_mode<synchronous>, transform_indices = @transform_2, window_bounds = array<i64: 1, 32>}, {pipeline_mode = #tpu.pipeline_mode<synchronous>, transform_indices = @transform_3, window_bounds = array<i64: 32, 96>}, {transform_indices = @transform_4, window_bounds = array<i64: 32, 96>}]} {
    %c0 = arith.constant 0 : index
    %c0_0 = arith.constant 0 : index
    %0 = vector.load %arg1[%c0, %c0_0] : memref<32x32xf32, #tpu.memory_space<vmem>>, vector<32x32xf32>
    %cst = arith.constant dense<0.000000e+00> : vector<32xf32>
    %1 = vector.multi_reduction <add>, %0, %cst [1] : vector<32x32xf32> to vector<32xf32>
    %2 = vector.shape_cast %1 : vector<32xf32> to vector<32x1xf32>
    %cst_1 = arith.constant 3.200000e+01 : f32
    %3 = vector.broadcast %cst_1 : f32 to vector<32x1xf32>
    %4 = arith.divf %2, %3 : vector<32x1xf32>
    %5 = vector.broadcast %4 : vector<32x1xf32> to vector<32x32xf32>
    %6 = arith.subf %0, %5 : vector<32x32xf32>
    %7 = arith.mulf %6, %6 : vector<32x32xf32>
    %cst_2 = arith.constant dense<0.000000e+00> : vector<32xf32>
    %8 = vector.multi_reduction <add>, %7, %cst_2 [1] : vector<32x32xf32> to vector<32xf32>
    %9 = vector.shape_cast %8 : vector<32xf32> to vector<32x1xf32>
    %cst_3 = arith.constant 3.200000e+01 : f32
    %10 = vector.broadcast %cst_3 : f32 to vector<32x1xf32>
    %11 = arith.divf %9, %10 : vector<32x1xf32>
    %cst_4 = arith.constant 9.99999974E-6 : f32
    %12 = vector.broadcast %cst_4 : f32 to vector<32x1xf32>
    %13 = arith.addf %11, %12 : vector<32x1xf32>
    %14 = math.rsqrt %13 : vector<32x1xf32>
    %15 = vector.broadcast %14 : vector<32x1xf32> to vector<32x32xf32>
    %16 = arith.mulf %6, %15 : vector<32x32xf32>
    %c0_5 = arith.constant 0 : index
    %c0_6 = arith.constant 0 : index
    %17 = vector.load %arg2[%c0_5, %c0_6] : memref<1x32xf32, #tpu.memory_space<vmem>>, vector<1x32xf32>
    %18 = vector.broadcast %17 : vector<1x32xf32> to vector<32x32xf32>
    %19 = arith.mulf %16, %18 : vector<32x32xf32>
    %c0_7 = arith.constant 0 : index
    %c0_8 = arith.constant 0 : index
    %20 = vector.load %arg3[%c0_7, %c0_8] : memref<1x32xf32, #tpu.memory_space<vmem>>, vector<1x32xf32>
    %21 = vector.broadcast %20 : vector<1x32xf32> to vector<32x32xf32>
    %22 = arith.addf %19, %21 : vector<32x32xf32>
    %23 = arith.truncf %22 : vector<32x32xf32> to vector<32x32xbf16>
    %c0_9 = arith.constant 0 : index
    %c0_10 = arith.constant 0 : index
    %24 = vector.load %arg4[%c0_9, %c0_10] : memref<32x96xbf16, #tpu.memory_space<vmem>>, vector<32x96xbf16>
    %cst_11 = arith.constant dense<0.000000e+00> : vector<32x96xf32>
    %25 = tpu.matmul %23, %24, %cst_11 {dimension_numbers = #tpu.dot_dimension_numbers<[1], [0], [0], [1], [0, 0, 1, 1], [], []>} : vector<32x32xbf16>, vector<32x96xbf16>, vector<32x96xf32> -> vector<32x96xf32>
    %26 = arith.truncf %25 : vector<32x96xf32> to vector<32x96xbf16>
    %c0_12 = arith.constant 0 : index
    %c0_13 = arith.constant 0 : index
    %27 = vector.load %arg5[%c0_12, %c0_13] : memref<32x96xbf16, #tpu.memory_space<vmem>>, vector<32x96xbf16>
    tpu.vector_store %arg5[%c0_12, %c0_13], %26 {strides = array<i32>} : memref<32x96xbf16, #tpu.memory_space<vmem>>, vector<32x96xbf16>,
    return
  }
  func.func @transform_0(%arg0: i32) -> (i32, i32) {
    %c0_i32 = arith.constant 0 : i32
    %c0_i32_0 = arith.constant 0 : i32
    return %arg0, %c0_i32 : i32, i32
  }
  func.func @transform_1(%arg0: i32) -> (i32, i32) {
    %c0_i32 = arith.constant 0 : i32
    %c0_i32_0 = arith.constant 0 : i32
    %c0_i32_1 = arith.constant 0 : i32
    return %c0_i32, %c0_i32_0 : i32, i32
  }
  func.func @transform_2(%arg0: i32) -> (i32, i32) {
    %c0_i32 = arith.constant 0 : i32
    %c0_i32_0 = arith.constant 0 : i32
    %c0_i32_1 = arith.constant 0 : i32
    return %c0_i32, %c0_i32_0 : i32, i32
  }
  func.func @transform_3(%arg0: i32) -> (i32, i32) {
    %c0_i32 = arith.constant 0 : i32
    %c0_i32_0 = arith.constant 0 : i32
    %c0_i32_1 = arith.constant 0 : i32
    return %c0_i32, %c0_i32_0 : i32, i32
  }
  func.func @transform_4(%arg0: i32) -> (i32, i32) {
    %c0_i32 = arith.constant 0 : i32
    %c0_i32_0 = arith.constant 0 : i32
    return %arg0, %c0_i32 : i32, i32
  }
}

</mosaic_0001>

<llo_original>
// kernel: tpu_custom_call.1
$region0: #{tpu_custom_call.1}
  #allocation0 [shape = 'u32[]', space=smem, size = 0x4, offset = 0x4, fixed_abs, tag = 'smem constant byte address 0x4 - core index']
  #allocation1 [shape = 'u32[72,128]{1,0:T(1,128)}', space=vmem, size = 0x9000, scoped, tag = 'internal scratch']
  %s0 = inlined_call_operand.hbm [shape: f32[32,32], index: 0, kind: input, shape index: {}]
  %s1 = inlined_call_operand.hbm [shape: f32[1,32], index: 1, kind: input, shape index: {}]
  %s2 = inlined_call_operand.vmem [shape: f32[1,32], index: 2, kind: input, shape index: {}]
  %s3 = inlined_call_operand.hbm [shape: bf16[32,96], index: 3, kind: input, shape index: {}]
  %s4 = inlined_call_operand.hbm [shape: bf16[32,96], index: 4, kind: output, shape index: {}]
  %s5 = sld [smem:[#allocation0]]
  $region38: #{tpu_custom_call.1} parent=0
    _
  %s7 = ssub.s32 1, %s5
  %s8 = scalar_select 0, %s7, %s5
  $region1: #{tpu_custom_call.1} parent=0
    #allocation2 [shape = 'u8[16384]{0}', space=vmem, size = 0x4000, scoped, tag = 'input window, operand 0, single buffered']
    #allocation3 [shape = 's32[1]{0}', space=sflag, size = 0x4, scoped, tag = 'scoped memory for tpu_custom_call.1']
    #allocation4 [shape = 's32[1]{0}', space=sflag, size = 0x4, scoped, tag = 'scoped memory for tpu_custom_call.1']
    #allocation5 [shape = 'u8[512]{0}', space=vmem, size = 0x400, scoped, tag = 'input window, operand 1, single buffered']
    #allocation6 [shape = 's32[1]{0}', space=sflag, size = 0x4, scoped, tag = 'scoped memory for tpu_custom_call.1']
    #allocation7 [shape = 'u8[8192]{0}', space=vmem, size = 0x2000, scoped, tag = 'input window, operand 3, single buffered']
    #allocation8 [shape = 'u8[8192]{0}', space=vmem, size = 0x2000, scoped, tag = 'output window, operand 0, single buffered']
    %9 = vsyncpa [#allocation3], 0
    %10 = vsyncpa [#allocation6], 0
    %11 = vsyncpa [#allocation4], 0
    // Predicated region
    $region2: #{tpu_custom_call.1} parent=1 // pred_check
      _
    $region3: #{tpu_custom_call.1} parent=1 // pred_check_branch
      %13 = sbr.rel (0) target = $region5
    $region4: #{tpu_custom_call.1} parent=1 // pred_region
      %15 = vsyncadd [#allocation3], 0
      %s16 = sshll.u32 %s0, 4
      %s17 = int_to_ptr.hbm [resolvable:$true] %s16
      %s18 = sshll.u32 [#allocation2], 4
      %s19 = int_to_ptr.vmem [resolvable:$true] %s18
      %24 = dma.hbm_to_vmem [thread:$0]  %s17, 512, %s19, [#allocation3], 128, 128, 8
    $region5: #{tpu_custom_call.1} parent=1 // pred_fallthru
      _
    // Predicated region
    $region6: #{tpu_custom_call.1} parent=1 // pred_check
      _
    $region7: #{tpu_custom_call.1} parent=1 // pred_check_branch
      %26 = sbr.rel (0) target = $region9
    $region8: #{tpu_custom_call.1} parent=1 // pred_region
      %28 = vsyncadd [#allocation6], 0
      %s30 = sshll.u32 %s1, 4
      %s31 = int_to_ptr.hbm [resolvable:$true] %s30
      %s32 = sshll.u32 [#allocation5], 4
      %s33 = int_to_ptr.vmem [resolvable:$true] %s32
      %35 = dma.hbm_to_vmem [thread:$0]  %s31, 16, %s33, [#allocation6]
    $region9: #{tpu_custom_call.1} parent=1 // pred_fallthru
      _
    // Predicated region
    $region10: #{tpu_custom_call.1} parent=1 // pred_check
      _
    $region11: #{tpu_custom_call.1} parent=1 // pred_check_branch
      %37 = sbr.rel (0) target = $region13
    $region12: #{tpu_custom_call.1} parent=1 // pred_region
      _
    $region13: #{tpu_custom_call.1} parent=1 // pred_fallthru
      _
    // Predicated region
    $region14: #{tpu_custom_call.1} parent=1 // pred_check
      _
    $region15: #{tpu_custom_call.1} parent=1 // pred_check_branch
      %39 = sbr.rel (0) target = $region17
    $region16: #{tpu_custom_call.1} parent=1 // pred_region
      %41 = vsyncadd [#allocation6], 0
      %s42 = sshll.u32 %s3, 4
      %s43 = int_to_ptr.hbm [resolvable:$true] %s42
      %s44 = sshll.u32 [#allocation7], 4
      %s45 = int_to_ptr.vmem [resolvable:$true] %s44
      %50 = dma.hbm_to_vmem [thread:$0]  %s43, 256, %s45, [#allocation6], 64, 64, 4
    $region17: #{tpu_custom_call.1} parent=1 // pred_fallthru
      _
    // Predicated region
    $region18: #{tpu_custom_call.1} parent=1 // pred_check
      _
    $region19: #{tpu_custom_call.1} parent=1 // pred_check_branch
      %52 = sbr.rel (0) target = $region21
    $region20: #{tpu_custom_call.1} parent=1 // pred_region
      %54 = dma.done [#allocation3], 512
    $region21: #{tpu_custom_call.1} parent=1 // pred_fallthru
      _
    // Predicated region
    $region22: #{tpu_custom_call.1} parent=1 // pred_check
      _
    $region23: #{tpu_custom_call.1} parent=1 // pred_check_branch
      %56 = sbr.rel (0) target = $region25
    $region24: #{tpu_custom_call.1} parent=1 // pred_region
      %58 = dma.done [#allocation6], 16
    $region25: #{tpu_custom_call.1} parent=1 // pred_fallthru
      _
    // Predicated region
    $region26: #{tpu_custom_call.1} parent=1 // pred_check
      _
    $region27: #{tpu_custom_call.1} parent=1 // pred_check_branch
      %60 = sbr.rel (0) target = $region29
    $region28: #{tpu_custom_call.1} parent=1 // pred_region
      %62 = dma.done [#allocation6], 256
    $region29: #{tpu_custom_call.1} parent=1 // pred_fallthru
      _
    %v64 = vld [vmem:[#allocation2] sm:$0xff]
    %v65 = vld [vmem:[#allocation2 + $0x8] sm:$0xff]
    %v66 = vld [vmem:[#allocation2 + $0x10] sm:$0xff]
    %v67 = vld [vmem:[#allocation2 + $0x18] sm:$0xff]
    %vm68 = vcmask 261120
    %v69 = vsel %vm68, %v64, 0.0
    %70 = vadd.xlane.f32.xlu0 %v69
    %v71 = vpop.xlane.xlu0 %70
    %v72 = vsel %vm68, %v65, 0.0
    %73 = vadd.xlane.f32.xlu0 %v72
    %v74 = vpop.xlane.xlu0 %73
    %v75 = vsel %vm68, %v66, 0.0
    %76 = vadd.xlane.f32.xlu0 %v75
    %v77 = vpop.xlane.xlu0 %76
    %v78 = vsel %vm68, %v67, 0.0
    %79 = vadd.xlane.f32.xlu0 %v78
    %v80 = vpop.xlane.xlu0 %79
    %v81 = vrcp.pop 32.0
    %v82 = vmul.f32 32.0, %v81
    %v83 = vsub.f32 1.0, %v82
    %v84 = vmul.f32 %v81, %v83
    %v85 = vadd.f32 %v81, %v84
    %vm86 = vweird.f32 %v81
    %v87 = vsel %vm86, %v81, %v85
    %v88 = vmul.f32 %v71, %v87
    %v89 = vmul.f32 %v74, %v87
    %v90 = vmul.f32 %v77, %v87
    %v91 = vmul.f32 %v80, %v87
    %v92 = vsub.f32 %v64, %v88
    %v93 = vsub.f32 %v65, %v89
    %v94 = vsub.f32 %v66, %v90
    %v95 = vsub.f32 %v67, %v91
    %v96 = vmul.f32 %v92, %v92
    %v97 = vmul.f32 %v93, %v93
    %v98 = vmul.f32 %v94, %v94
    %v99 = vmul.f32 %v95, %v95
    %v100 = vsel %vm68, %v96, 0.0
    %101 = vadd.xlane.f32.xlu0 %v100
    %v102 = vpop.xlane.xlu0 %101
    %v103 = vsel %vm68, %v97, 0.0
    %104 = vadd.xlane.f32.xlu0 %v103
    %v105 = vpop.xlane.xlu0 %104
    %v106 = vsel %vm68, %v98, 0.0
    %107 = vadd.xlane.f32.xlu0 %v106
    %v108 = vpop.xlane.xlu0 %107
    %v109 = vsel %vm68, %v99, 0.0
    %110 = vadd.xlane.f32.xlu0 %v109
    %v111 = vpop.xlane.xlu0 %110
    %v112 = vmul.f32 %v102, %v87
    %v113 = vmul.f32 %v105, %v87
    %v114 = vmul.f32 %v108, %v87
    %v115 = vmul.f32 %v111, %v87
    %v116 = vadd.f32 %v112, 1e-05
    %v117 = vadd.f32 %v113, 1e-05
    %v118 = vadd.f32 %v114, 1e-05
    %v119 = vadd.f32 %v115, 1e-05
    %v120 = vrsqrt.pop %v116
    %v121 = vmul.f32 %v120, %v116
    %v122 = vmul.f32 %v121, %v120
    %v123 = vmul.f32 0.5, %v122
    %v124 = vsub.f32 1.5, %v123
    %v125 = vmul.f32 %v120, %v124
    %vm126 = vweird.f32 %v116
    %vm127 = vweird.f32 %v120
    %vm128 = vmor %vm126, %vm127
    %v129 = vsel %vm128, %v120, %v125
    %v130 = vrsqrt.pop %v117
    %v131 = vmul.f32 %v130, %v117
    %v132 = vmul.f32 %v131, %v130
    %v133 = vmul.f32 0.5, %v132
    %v134 = vsub.f32 1.5, %v133
    %v135 = vmul.f32 %v130, %v134
    %vm136 = vweird.f32 %v117
    %vm137 = vweird.f32 %v130
    %vm138 = vmor %vm136, %vm137
    %v139 = vsel %vm138, %v130, %v135
    %v140 = vrsqrt.pop %v118
    %v141 = vmul.f32 %v140, %v118
    %v142 = vmul.f32 %v141, %v140
    %v143 = vmul.f32 0.5, %v142
    %v144 = vsub.f32 1.5, %v143
    %v145 = vmul.f32 %v140, %v144
    %vm146 = vweird.f32 %v118
    %vm147 = vweird.f32 %v140
    %vm148 = vmor %vm146, %vm147
    %v149 = vsel %vm148, %v140, %v145
    %v150 = vrsqrt.pop %v119
    %v151 = vmul.f32 %v150, %v119
    %v152 = vmul.f32 %v151, %v150
    %v153 = vmul.f32 0.5, %v152
    %v154 = vsub.f32 1.5, %v153
    %v155 = vmul.f32 %v150, %v154
    %vm156 = vweird.f32 %v119
    %vm157 = vweird.f32 %v150
    %vm158 = vmor %vm156, %vm157
    %v159 = vsel %vm158, %v150, %v155
    %v160 = vmul.f32 %v92, %v129
    %v161 = vmul.f32 %v93, %v139
    %v162 = vmul.f32 %v94, %v149
    %v163 = vmul.f32 %v95, %v159
    %v164 = vld [vmem:[#allocation5] sm:$0x1]
    %v166 = vperm.slane %v164, 0
    %v168 = vmul.f32 %v160, %v166
    %v169 = vmul.f32 %v161, %v166
    %v170 = vmul.f32 %v162, %v166
    %v171 = vmul.f32 %v163, %v166
    %v172 = vld [vmem:[%s2] sm:$0x1]
    %v174 = vperm.slane %v172, 0
    %v176 = vadd.f32 %v168, %v174
    %v177 = vadd.f32 %v169, %v174
    %v178 = vadd.f32 %v170, %v174
    %v179 = vadd.f32 %v171, %v174
    %v180 = vpack.c.bf16 %v177, %v176
    %v181 = vpack.c.bf16 %v179, %v178
    %v182 = vld [vmem:[#allocation7] sm:$0xf]
    %v183 = vld [vmem:[#allocation7 + $0x4] sm:$0xf]
    %v184 = vld [vmem:[#allocation7 + $0x8] sm:$0xf]
    %v185 = vld [vmem:[#allocation7 + $0xc] sm:$0xf]
    %v190 = vunpack.c.l.b16 %v182
    %v191 = vunpack.c.l.b16 %v183
    %v192 = vunpack.c.l.b16 %v184
    %v193 = vunpack.c.l.b16 %v185
    %v194 = vpack.c.b16 %v191, %v190
    %v195 = vpack.c.b16 %v193, %v192
    %v199 = vsel %vm68, %v180, 0
    %v202 = vsel %vm68, %v181, 0
    %204 = vmatpush.bf16.msra.mxu0 0
    %205 = vmatpush.bf16.msra.mxu0 0
    %206 = vmatpush.bf16.msra.mxu0 0
    %207 = vmatpush.bf16.msra.mxu0 0
    %208 = vmatpush.bf16.msra.mxu0 0
    %209 = vmatpush.bf16.msra.mxu0 0
    %210 = vmatpush.bf16.msra.mxu0 %v195
    %211 = vmatpush.bf16.msra.mxu0 %v194
    %212 = vmatmul.bf16.gmra.mxu0 %v199
    %v213 = vpop.f32.mrf.mxu0
    %v214 = vadd.f32 0.0, %v213
    %v215 = vpop.f32.mrf.mxu0
    %v216 = vadd.f32 0.0, %v215
    %217 = vmatmul.bf16.gmra.mxu0 %v202
    %v218 = vpop.f32.mrf.mxu0
    %v219 = vadd.f32 0.0, %v218
    %v220 = vpop.f32.mrf.mxu0
    %v221 = vadd.f32 0.0, %v220
    %222 = vdwg.mxu0
    %v223 = vpack.c.bf16 %v214, %v214
    %v224 = vpack.c.bf16 %v216, %v216
    %v225 = vpack.c.bf16 %v219, %v219
    %v226 = vpack.c.bf16 %v221, %v221
    %vm227 = vcmask 781312
    %228 = vst.msk [vmem:[#allocation8] sm:$0xf] %vm227, %v223
    %229 = vst.msk [vmem:[#allocation8 + $0x4] sm:$0xf] %vm227, %v224
    %230 = vst.msk [vmem:[#allocation8 + $0x8] sm:$0xf] %vm227, %v225
    %231 = vst.msk [vmem:[#allocation8 + $0xc] sm:$0xf] %vm227, %v226
    // Predicated region
    $region30: #{tpu_custom_call.1} parent=1 // pred_check
      _
    $region31: #{tpu_custom_call.1} parent=1 // pred_check_branch
      %233 = sbr.rel (0) target = $region33
    $region32: #{tpu_custom_call.1} parent=1 // pred_region
      %235 = vsyncadd [#allocation4], 0
      %s236 = sshll.u32 [#allocation8], 4
      %s237 = int_to_ptr.vmem [resolvable:$true] %s236
      %s238 = sshll.u32 %s4, 4
      %s239 = int_to_ptr.hbm [resolvable:$true] %s238
      %244 = dma.vmem_to_hbm [thread:$0]  %s237, 256, %s239, [#allocation4], 64, 64, 4
    $region33: #{tpu_custom_call.1} parent=1 // pred_fallthru
      _
    // Predicated region
    $region34: #{tpu_custom_call.1} parent=1 // pred_check
      _
    $region35: #{tpu_custom_call.1} parent=1 // pred_check_branch
      %246 = sbr.rel (0) target = $region37
    $region36: #{tpu_custom_call.1} parent=1 // pred_region
      %248 = dma.done [#allocation4], 256
    $region37: #{tpu_custom_call.1} parent=1 // pred_fallthru
      _
    %249 = vsyncpa [#allocation3], 1
    %250 = vsyncpa [#allocation6], 1
    %251 = vsyncpa [#allocation4], 1

</llo_original>
